<compile_context>
chip_gen: v7x
topology: tpu7x:2x2x1
jax: 0.10.0
libtpu: 0.0.40
codegen_flags: <defaults>
</compile_context>

<pallas_src>
import math
import jax
import jax.numpy as jnp
from jax import lax
from jax.experimental import pallas as pl
from jax.experimental.pallas import tpu as pltpu

# ---------------- model config (small, consistent with the module) ----------------
B = 2          # batch
N = 16         # sequence length (must be a multiple of 2*W for sliding_chunks)
D = 32         # d_model
H = 4          # n_heads
HD = D // H    # head_dim
F_DIM = 64     # d_ffn
W = 4          # one-sided attention window (attention_window)
EPS = 1e-6     # RMSNorm eps
NEG = -1e9     # additive mask value (exp underflows to exactly 0)
BN = B * N     # flattened batch*sequence


# ---------------- Pallas kernel: whole block, both batch elements, one step ----------------
def block_kernel(x_ref,                        # (B*N, D) flattened input
                 band_ref,                     # (B*N, H*B*N) additive band+batch mask (0 / -1e9)
                 mask3_ref,                    # (H*B*N, 3D) block-diagonal head mask (0/1) over [k|v|ones]
                 an_w_ref,                     # attn RMSNorm weight (1, D)
                 wqkv_ref, bqkv_ref,           # extended QKV projection (D, 4D), (1, 4D)
                 fn_w_ref,                     # ffn RMSNorm weight (1, D)
                 w13_ref, b13_ref,             # fused gate|up MLP weight (D, 2F), (1, 2F)
                 w2_ref, b2_ref,               # down projection (F, D), (1, D)
                 o_ref):
    x = x_ref[...]                             # (BN, D) float32

    def rmsnorm(v, w):
        ms = jnp.sum(v * v, axis=-1, keepdims=True) * (1.0 / D)
        return v * lax.rsqrt(ms + EPS) * w     # rsqrt -> EUP

    # ---- attention branch ----
    h = rmsnorm(x, an_w_ref[...])                                            # (BN, D)
    # qkv[:, :D]   = q (already scaled by 1/sqrt(HD) via fused weight)
    # qkv[:, D:2D] = k, qkv[:, 2D:3D] = v, qkv[:, 3D:] = exactly 1.0 (zero W, one bias)
    qkv = jnp.dot(h, wqkv_ref[...], preferred_element_type=jnp.float32) + bqkv_ref[...]   # (BN, 4D)
    q = qkv[:, :D]

    # One sublane-tile + one mask multiply builds all three block-diagonal
    # ("stacked heads") operands at once: [k_bd | v_bd | kv_mask].
    tiled = jnp.tile(qkv[:, D:], (H, 1)) * mask3_ref[...]                    # (H*BN, 3D)
    k_bd = tiled[:, :D]                                                      # (H*BN, D)
    vmsk = tiled[:, D:]                                                      # (H*BN, 2D) = [v_bd | kv_mask]

    # s[i, hi*BN + j] = q_head_hi[i] . k_head_hi[j]  -- all heads in ONE matmul.
    s = lax.dot_general(q, k_bd, (((1,), (1,)), ((), ())),
                        preferred_element_type=jnp.float32)                  # (BN, H*BN) = (32, 128)
    s = s + band_ref[...]                      # sliding-window band + batch-separation mask

    # Hand-rolled softmax, normalized per head block.
    # Global row max is shift-invariant within each block (diag always valid).
    # TODO(synk): with extreme score dynamic range (>~80) a per-head-block max would be needed.
    m = jnp.max(s, axis=-1, keepdims=True)                                   # (BN, 1)
    e = jnp.exp(s - m)                         # masked entries -> exactly 0

    # Context and denominator in ONE MXU call: (32,128)@(128,64) -> (32,64).
    ud = jnp.dot(e, vmsk, preferred_element_type=jnp.float32)                # [out_u | denom]
    attn = ud[:, :D] * pl.reciprocal(ud[:, D:], approx=True)                 # EUP reciprocal

    x1 = x + attn                              # residual

    # ---- feed-forward branch (SwiGLU MLP) ----
    h2 = rmsnorm(x1, fn_w_ref[...])
    a13 = jnp.dot(h2, w13_ref[...], preferred_element_type=jnp.float32) + b13_ref[...]    # (BN, 2F) = (32, 128)
    g = a13[:, :F_DIM]
    c = a13[:, F_DIM:]
    ffn = jnp.dot(g * jax.nn.sigmoid(g) * c, w2_ref[...],
                  preferred_element_type=jnp.float32) + b2_ref[...]

    o_ref[...] = x1 + ffn


def build_masks():
    pos = jnp.arange(BN) % N
    bat = jnp.arange(BN) // N
    same_batch = bat[:, None] == bat[None, :]
    band = (jnp.abs(pos[:, None] - pos[None, :]) <= W) & same_batch          # (BN, BN) bool
    band_add = jnp.where(jnp.tile(band, (1, H)), 0.0, NEG).astype(jnp.float32)   # (BN, H*BN)

    head_of_row = jnp.repeat(jnp.arange(H), BN)                              # (H*BN,)
    head_of_col = (jnp.arange(3 * D) % D) // HD                              # (3D,)
    mask3 = (head_of_row[:, None] == head_of_col[None, :]).astype(jnp.float32)   # (H*BN, 3D)
    return band_add, mask3


def fuse_params(params):
    """Host-side, one-time parameter prep: fuse QKV (+ a ones column block for
    the softmax denominator) and gate|up weights, fold the 1/sqrt(head_dim)
    query scale into the fused QKV weight."""
    (an_w, wq, bq, wk, bk, wv, bv, fn_w, w1, b1, w3, b3, w2, b2) = params
    sc = 1.0 / math.sqrt(HD)
    wqkv = jnp.concatenate(
        [wq * sc, wk, wv, jnp.zeros((D, D), jnp.float32)], axis=1)           # (D, 4D)
    bqkv = jnp.concatenate(
        [bq * sc, bk, bv, jnp.ones((1, D), jnp.float32)], axis=1)            # (1, 4D)
    w13 = jnp.concatenate([w1, w3], axis=1)                                  # (D, 2F)
    b13 = jnp.concatenate([b1, b3], axis=1)                                  # (1, 2F)
    return (an_w, wqkv, bqkv, fn_w, w13, b13, w2, b2)


def block_forward(x, fused_params, band_add, mask3):
    (an_w, wqkv, bqkv, fn_w, w13, b13, w2, b2) = fused_params
    x2d = x.reshape(BN, D)                     # trivial host-side reshape (contiguous)

    # Rough advisory cost (5 small matmuls + softmax/SiLU transcendentals).
    cost = pl.CostEstimate(flops=1_441_792, transcendentals=7_232, bytes_accessed=116_096)

    out2d = pl.pallas_call(
        block_kernel,
        out_shape=jax.ShapeDtypeStruct((BN, D), jnp.float32),
        cost_estimate=cost,
        # Single invocation (no grid): all operands are full-array VMEM blocks,
        # DMA'd once.  Total resident footprint ~130 KiB << VMEM on v5e/v6e/v7x.
    )(x2d, band_add, mask3, an_w, wqkv, bqkv, fn_w, w13, b13, w2, b2)
    return out2d.reshape(B, N, D)


# ---------------- pure-JAX reference (same math, vectorized, exact softmax) ----------------
def block_ref(x, params):
    (an_w, wq, bq, wk, bk, wv, bv, fn_w, w1, b1, w3, b3, w2, b2) = params

    def rmsnorm(v, w):
        m = jnp.mean(v * v, axis=-1, keepdims=True)
        return v * lax.rsqrt(m + EPS) * w

    h = rmsnorm(x, an_w)                                        # (B,N,D)
    q = (h @ wq + bq) / math.sqrt(HD)
    k = h @ wk + bk
    v = h @ wv + bv
    qh = q.reshape(B, N, H, HD)
    kh = k.reshape(B, N, H, HD)
    vh = v.reshape(B, N, H, HD)
    s = jnp.einsum("bnhd,bmhd->bhnm", qh, kh)
    idx = jnp.arange(N)
    band = jnp.abs(idx[:, None] - idx[None, :]) <= W
    s = jnp.where(band[None, None], s, -jnp.inf)
    p = jax.nn.softmax(s, axis=-1)
    ctx = jnp.einsum("bhnm,bmhd->bnhd", p, vh).reshape(B, N, D)
    x1 = x + ctx
    h2 = rmsnorm(x1, fn_w)
    a = h2 @ w1 + b1
    ffn = (a * jax.nn.sigmoid(a) * (h2 @ w3 + b3)) @ w2 + b2
    return x1 + ffn


# ---------------- deterministic parameter init ----------------
def init_params(key):
    ks = jax.random.split(key, 10)
    scale = 0.05
    an_w = jnp.ones((1, D), jnp.float32)                       # RMSNorm init = ones
    fn_w = jnp.ones((1, D), jnp.float32)
    # nn.Linear stores (out,in); we pre-transpose to (in,out) for y = x @ W + b.
    wq = scale * jax.random.normal(ks[0], (D, D), jnp.float32)
    wk = scale * jax.random.normal(ks[1], (D, D), jnp.float32)
    wv = scale * jax.random.normal(ks[2], (D, D), jnp.float32)
    bq = scale * jax.random.normal(ks[3], (1, D), jnp.float32)
    bk = scale * jax.random.normal(ks[4], (1, D), jnp.float32)
    bv = scale * jax.random.normal(ks[5], (1, D), jnp.float32)
    w1 = scale * jax.random.normal(ks[6], (D, F_DIM), jnp.float32)
    w3 = scale * jax.random.normal(ks[7], (D, F_DIM), jnp.float32)
    w2 = scale * jax.random.normal(ks[8], (F_DIM, D), jnp.float32)
    b1 = jnp.zeros((1, F_DIM), jnp.float32)
    b3 = jnp.zeros((1, F_DIM), jnp.float32)
    b2 = jnp.zeros((1, D), jnp.float32)
    return (an_w, wq, bq, wk, bk, wv, bv, fn_w, w1, b1, w3, b3, w2, b2)


if __name__ == "__main__":
    key = jax.random.PRNGKey(0)
    kx, kp = jax.random.split(key)
    x = jax.random.normal(kx, (B, N, D), jnp.float32)
    params = init_params(kp)
    fused = fuse_params(params)
    band_add, mask3 = build_masks()

    out = jax.block_until_ready(block_forward(x, fused, band_add, mask3))
    ref = jax.block_until_ready(block_ref(x, params))

    assert out.shape == (B, N, D)
    assert bool(jnp.all(jnp.isfinite(out))), "non-finite output"
    # tolerance slightly looser than 1e-4 to accommodate the EUP approximate reciprocal
    assert bool(jnp.allclose(out, ref, atol=1e-3, rtol=1e-3)), "mismatch vs reference"
    print("KERNEL_OK")
</pallas_src>

<mosaic_0001>
module attributes {stable_mosaic.version = 11 : i64} {
  func.func @block_kernel(%arg0: memref<32x32xf32, #tpu.memory_space<vmem>>, %arg1: memref<32x128xf32, #tpu.memory_space<vmem>>, %arg2: memref<128x96xf32, #tpu.memory_space<vmem>>, %arg3: memref<1x32xf32, #tpu.memory_space<vmem>>, %arg4: memref<32x128xf32, #tpu.memory_space<vmem>>, %arg5: memref<1x128xf32, #tpu.memory_space<vmem>>, %arg6: memref<1x32xf32, #tpu.memory_space<vmem>>, %arg7: memref<32x128xf32, #tpu.memory_space<vmem>>, %arg8: memref<1x128xf32, #tpu.memory_space<vmem>>, %arg9: memref<64x32xf32, #tpu.memory_space<vmem>>, %arg10: memref<1x32xf32, #tpu.memory_space<vmem>>, %arg11: memref<32x32xf32, #tpu.memory_space<vmem>>) attributes {dimension_semantics = [], scalar_prefetch = 0 : i64, scratch_operands = 0 : i64, tpu.core_type = #tpu.core_type<tc>} {
    %c0 = arith.constant 0 : index
    %c0_0 = arith.constant 0 : index
    %0 = vector.load %arg0[%c0, %c0_0] : memref<32x32xf32, #tpu.memory_space<vmem>>, vector<32x32xf32>
    %c0_1 = arith.constant 0 : index
    %c0_2 = arith.constant 0 : index
    %1 = vector.load %arg3[%c0_1, %c0_2] : memref<1x32xf32, #tpu.memory_space<vmem>>, vector<1x32xf32>
    %2 = arith.mulf %0, %0 : vector<32x32xf32>
    %cst = arith.constant dense<0.000000e+00> : vector<32xf32>
    %3 = vector.multi_reduction <add>, %2, %cst [1] : vector<32x32xf32> to vector<32xf32>
    %4 = vector.shape_cast %3 : vector<32xf32> to vector<32x1xf32>
    %cst_3 = arith.constant 3.125000e-02 : f32
    %5 = vector.broadcast %cst_3 : f32 to vector<32x1xf32>
    %6 = arith.mulf %4, %5 : vector<32x1xf32>
    %cst_4 = arith.constant 9.99999997E-7 : f32
    %7 = vector.broadcast %cst_4 : f32 to vector<32x1xf32>
    %8 = arith.addf %6, %7 : vector<32x1xf32>
    %9 = math.rsqrt %8 : vector<32x1xf32>
    %10 = vector.broadcast %9 : vector<32x1xf32> to vector<32x32xf32>
    %11 = arith.mulf %0, %10 : vector<32x32xf32>
    %12 = vector.broadcast %1 : vector<1x32xf32> to vector<32x32xf32>
    %13 = arith.mulf %11, %12 : vector<32x32xf32>
    %c0_5 = arith.constant 0 : index
    %c0_6 = arith.constant 0 : index
    %14 = vector.load %arg4[%c0_5, %c0_6] : memref<32x128xf32, #tpu.memory_space<vmem>>, vector<32x128xf32>
    %cst_7 = arith.constant dense<0.000000e+00> : vector<32x128xf32>
    %15 = tpu.matmul %13, %14, %cst_7 {dimension_numbers = #tpu.dot_dimension_numbers<[1], [0], [0], [1], [0, 0, 1, 1], [], []>} : vector<32x32xf32>, vector<32x128xf32>, vector<32x128xf32> -> vector<32x128xf32>
    %c0_8 = arith.constant 0 : index
    %c0_9 = arith.constant 0 : index
    %16 = vector.load %arg5[%c0_8, %c0_9] : memref<1x128xf32, #tpu.memory_space<vmem>>, vector<1x128xf32>
    %17 = vector.broadcast %16 : vector<1x128xf32> to vector<32x128xf32>
    %18 = arith.addf %15, %17 : vector<32x128xf32>
    %19 = vector.extract_strided_slice %18 {offsets = [0, 0], sizes = [32, 32], strides = [1, 1]} : vector<32x128xf32> to vector<32x32xf32>
    %20 = vector.extract_strided_slice %18 {offsets = [0, 32], sizes = [32, 96], strides = [1, 1]} : vector<32x128xf32> to vector<32x96xf32>
    %21 = tpu.concatenate %20, %20, %20, %20 in 0 : vector<32x96xf32>, vector<32x96xf32>, vector<32x96xf32>, vector<32x96xf32> -> vector<128x96xf32>
    %c0_10 = arith.constant 0 : index
    %c0_11 = arith.constant 0 : index
    %22 = vector.load %arg2[%c0_10, %c0_11] : memref<128x96xf32, #tpu.memory_space<vmem>>, vector<128x96xf32>
    %23 = arith.mulf %21, %22 : vector<128x96xf32>
    %24 = vector.extract_strided_slice %23 {offsets = [0, 0], sizes = [128, 32], strides = [1, 1]} : vector<128x96xf32> to vector<128x32xf32>
    %25 = vector.extract_strided_slice %23 {offsets = [0, 32], sizes = [128, 64], strides = [1, 1]} : vector<128x96xf32> to vector<128x64xf32>
    %cst_12 = arith.constant dense<0.000000e+00> : vector<32x128xf32>
    %26 = tpu.matmul %19, %24, %cst_12 {dimension_numbers = #tpu.dot_dimension_numbers<[1], [1], [0], [0], [0, 0, 1, 0], [], []>} : vector<32x32xf32>, vector<128x32xf32>, vector<32x128xf32> -> vector<32x128xf32>
    %c0_13 = arith.constant 0 : index
    %c0_14 = arith.constant 0 : index
    %27 = vector.load %arg1[%c0_13, %c0_14] : memref<32x128xf32, #tpu.memory_space<vmem>>, vector<32x128xf32>
    %28 = arith.addf %26, %27 : vector<32x128xf32>
    %cst_15 = arith.constant dense<0xFF800000> : vector<32xf32>
    %29 = vector.multi_reduction <maximumf>, %28, %cst_15 [1] : vector<32x128xf32> to vector<32xf32>
    %30 = vector.shape_cast %29 : vector<32xf32> to vector<32x1xf32>
    %31 = vector.broadcast %30 : vector<32x1xf32> to vector<32x128xf32>
    %32 = arith.subf %28, %31 : vector<32x128xf32>
    %33 = math.exp %32 : vector<32x128xf32>
    %cst_16 = arith.constant dense<0.000000e+00> : vector<32x64xf32>
    %34 = tpu.matmul %33, %25, %cst_16 {dimension_numbers = #tpu.dot_dimension_numbers<[1], [0], [0], [1], [0, 0, 1, 1], [], []>} : vector<32x128xf32>, vector<128x64xf32>, vector<32x64xf32> -> vector<32x64xf32>
    %35 = vector.extract_strided_slice %34 {offsets = [0, 0], sizes = [32, 32], strides = [1, 1]} : vector<32x64xf32> to vector<32x32xf32>
    %36 = vector.extract_strided_slice %34 {offsets = [0, 32], sizes = [32, 32], strides = [1, 1]} : vector<32x64xf32> to vector<32x32xf32>
    %37 = tpu.reciprocal %36 {approx = true} : vector<32x32xf32> -> vector<32x32xf32>
    %38 = arith.mulf %35, %37 : vector<32x32xf32>
    %39 = arith.addf %0, %38 : vector<32x32xf32>
    %c0_17 = arith.constant 0 : index
    %c0_18 = arith.constant 0 : index
    %40 = vector.load %arg6[%c0_17, %c0_18] : memref<1x32xf32, #tpu.memory_space<vmem>>, vector<1x32xf32>
    %41 = arith.mulf %39, %39 : vector<32x32xf32>
    %cst_19 = arith.constant dense<0.000000e+00> : vector<32xf32>
    %42 = vector.multi_reduction <add>, %41, %cst_19 [1] : vector<32x32xf32> to vector<32xf32>
    %43 = vector.shape_cast %42 : vector<32xf32> to vector<32x1xf32>
    %cst_20 = arith.constant 3.125000e-02 : f32
    %44 = vector.broadcast %cst_20 : f32 to vector<32x1xf32>
    %45 = arith.mulf %43, %44 : vector<32x1xf32>
    %cst_21 = arith.constant 9.99999997E-7 : f32
    %46 = vector.broadcast %cst_21 : f32 to vector<32x1xf32>
    %47 = arith.addf %45, %46 : vector<32x1xf32>
    %48 = math.rsqrt %47 : vector<32x1xf32>
    %49 = vector.broadcast %48 : vector<32x1xf32> to vector<32x32xf32>
    %50 = arith.mulf %39, %49 : vector<32x32xf32>
    %51 = vector.broadcast %40 : vector<1x32xf32> to vector<32x32xf32>
    %52 = arith.mulf %50, %51 : vector<32x32xf32>
    %c0_22 = arith.constant 0 : index
    %c0_23 = arith.constant 0 : index
    %53 = vector.load %arg7[%c0_22, %c0_23] : memref<32x128xf32, #tpu.memory_space<vmem>>, vector<32x128xf32>
    %cst_24 = arith.constant dense<0.000000e+00> : vector<32x128xf32>
    %54 = tpu.matmul %52, %53, %cst_24 {dimension_numbers = #tpu.dot_dimension_numbers<[1], [0], [0], [1], [0, 0, 1, 1], [], []>} : vector<32x32xf32>, vector<32x128xf32>, vector<32x128xf32> -> vector<32x128xf32>
    %c0_25 = arith.constant 0 : index
    %c0_26 = arith.constant 0 : index
    %55 = vector.load %arg8[%c0_25, %c0_26] : memref<1x128xf32, #tpu.memory_space<vmem>>, vector<1x128xf32>
    %56 = vector.broadcast %55 : vector<1x128xf32> to vector<32x128xf32>
    %57 = arith.addf %54, %56 : vector<32x128xf32>
    %58 = vector.extract_strided_slice %57 {offsets = [0, 0], sizes = [32, 64], strides = [1, 1]} : vector<32x128xf32> to vector<32x64xf32>
    %59 = vector.extract_strided_slice %57 {offsets = [0, 64], sizes = [32, 64], strides = [1, 1]} : vector<32x128xf32> to vector<32x64xf32>
    %60 = arith.negf %58 : vector<32x64xf32>
    %61 = math.exp %60 : vector<32x64xf32>
    %cst_27 = arith.constant 1.000000e+00 : f32
    %62 = vector.broadcast %cst_27 : f32 to vector<32x64xf32>
    %63 = arith.addf %62, %61 : vector<32x64xf32>
    %64 = arith.divf %62, %63 : vector<32x64xf32>
    %65 = arith.mulf %58, %64 : vector<32x64xf32>
    %66 = arith.mulf %65, %59 : vector<32x64xf32>
    %c0_28 = arith.constant 0 : index
    %c0_29 = arith.constant 0 : index
    %67 = vector.load %arg9[%c0_28, %c0_29] : memref<64x32xf32, #tpu.memory_space<vmem>>, vector<64x32xf32>
    %cst_30 = arith.constant dense<0.000000e+00> : vector<32x32xf32>
    %68 = tpu.matmul %66, %67, %cst_30 {dimension_numbers = #tpu.dot_dimension_numbers<[1], [0], [0], [1], [0, 0, 1, 1], [], []>} : vector<32x64xf32>, vector<64x32xf32>, vector<32x32xf32> -> vector<32x32xf32>
    %c0_31 = arith.constant 0 : index
    %c0_32 = arith.constant 0 : index
    %69 = vector.load %arg10[%c0_31, %c0_32] : memref<1x32xf32, #tpu.memory_space<vmem>>, vector<1x32xf32>
    %70 = vector.broadcast %69 : vector<1x32xf32> to vector<32x32xf32>
    %71 = arith.addf %68, %70 : vector<32x32xf32>
    %72 = arith.addf %39, %71 : vector<32x32xf32>
    %c0_33 = arith.constant 0 : index
    %c0_34 = arith.constant 0 : index
    %73 = vector.load %arg11[%c0_33, %c0_34] : memref<32x32xf32, #tpu.memory_space<vmem>>, vector<32x32xf32>
    tpu.vector_store %arg11[%c0_33, %c0_34], %72 {strides = array<i32>} : memref<32x32xf32, #tpu.memory_space<vmem>>, vector<32x32xf32>,
    return
  }
}

</mosaic_0001>

<llo_original>
// kernel: tpu_custom_call.1
$region0: #{tpu_custom_call.1}
  #allocation0 [shape = 'u32[]', space=smem, size = 0x4, offset = 0x4, fixed_abs, tag = 'smem constant byte address 0x4 - core index']
  #allocation1 [shape = 'u32[144,128]{1,0:T(1,128)}', space=vmem, size = 0x12000, scoped, tag = 'internal scratch']
  %s0 = inlined_call_operand.vmem [shape: f32[32,32], index: 0, kind: input, shape index: {}]
  %s1 = inlined_call_operand.vmem [shape: f32[32,128], index: 1, kind: input, shape index: {}]
  %s2 = inlined_call_operand.vmem [shape: f32[128,96], index: 2, kind: input, shape index: {}]
  %s3 = inlined_call_operand.vmem [shape: f32[1,32], index: 3, kind: input, shape index: {}]
  %s4 = inlined_call_operand.vmem [shape: f32[32,128], index: 4, kind: input, shape index: {}]
  %s5 = inlined_call_operand.vmem [shape: f32[1,128], index: 5, kind: input, shape index: {}]
  %s6 = inlined_call_operand.vmem [shape: f32[1,32], index: 6, kind: input, shape index: {}]
  %s7 = inlined_call_operand.vmem [shape: f32[32,128], index: 7, kind: input, shape index: {}]
  %s8 = inlined_call_operand.vmem [shape: f32[1,128], index: 8, kind: input, shape index: {}]
  %s9 = inlined_call_operand.vmem [shape: f32[64,32], index: 9, kind: input, shape index: {}]
  %s10 = inlined_call_operand.vmem [shape: f32[1,32], index: 10, kind: input, shape index: {}]
  %s11 = inlined_call_operand.hbm [shape: f32[32,32], index: 11, kind: output, shape index: {}]
  %s12 = sld [smem:[#allocation0]]
  $region54: #{tpu_custom_call.1} parent=0
    _
  %s14 = ssub.s32 1, %s12
  %s15 = scalar_select 0, %s14, %s12
  $region1: #{tpu_custom_call.1} parent=0
    #allocation2 [shape = 'u8[16384]{0}', space=vmem, size = 0x4000, scoped, tag = 'output window, operand 0, single buffered']
    #allocation3 [shape = 's32[1]{0}', space=sflag, size = 0x4, scoped, tag = 'scoped memory for tpu_custom_call.1']
    %16 = vsyncpa [#allocation3], 0
    // Predicated region
    $region2: #{tpu_custom_call.1} parent=1 // pred_check
      _
    $region3: #{tpu_custom_call.1} parent=1 // pred_check_branch
      %18 = sbr.rel (0) target = $region5
    $region4: #{tpu_custom_call.1} parent=1 // pred_region
      _
    $region5: #{tpu_custom_call.1} parent=1 // pred_fallthru
      _
    // Predicated region
    $region6: #{tpu_custom_call.1} parent=1 // pred_check
      _
    $region7: #{tpu_custom_call.1} parent=1 // pred_check_branch
      %20 = sbr.rel (0) target = $region9
    $region8: #{tpu_custom_call.1} parent=1 // pred_region
      _
    $region9: #{tpu_custom_call.1} parent=1 // pred_fallthru
      _
    // Predicated region
    $region10: #{tpu_custom_call.1} parent=1 // pred_check
      _
    $region11: #{tpu_custom_call.1} parent=1 // pred_check_branch
      %22 = sbr.rel (0) target = $region13
    $region12: #{tpu_custom_call.1} parent=1 // pred_region
      _
    $region13: #{tpu_custom_call.1} parent=1 // pred_fallthru
      _
    // Predicated region
    $region14: #{tpu_custom_call.1} parent=1 // pred_check
      _
    $region15: #{tpu_custom_call.1} parent=1 // pred_check_branch
      %24 = sbr.rel (0) target = $region17
    $region16: #{tpu_custom_call.1} parent=1 // pred_region
      _
    $region17: #{tpu_custom_call.1} parent=1 // pred_fallthru
      _
    // Predicated region
    $region18: #{tpu_custom_call.1} parent=1 // pred_check
      _
    $region19: #{tpu_custom_call.1} parent=1 // pred_check_branch
      %26 = sbr.rel (0) target = $region21
    $region20: #{tpu_custom_call.1} parent=1 // pred_region
      _
    $region21: #{tpu_custom_call.1} parent=1 // pred_fallthru
      _
    // Predicated region
    $region22: #{tpu_custom_call.1} parent=1 // pred_check
      _
    $region23: #{tpu_custom_call.1} parent=1 // pred_check_branch
      %28 = sbr.rel (0) target = $region25
    $region24: #{tpu_custom_call.1} parent=1 // pred_region
      _
    $region25: #{tpu_custom_call.1} parent=1 // pred_fallthru
      _
    // Predicated region
    $region26: #{tpu_custom_call.1} parent=1 // pred_check
      _
    $region27: #{tpu_custom_call.1} parent=1 // pred_check_branch
      %30 = sbr.rel (0) target = $region29
    $region28: #{tpu_custom_call.1} parent=1 // pred_region
      _
    $region29: #{tpu_custom_call.1} parent=1 // pred_fallthru
      _
    // Predicated region
    $region30: #{tpu_custom_call.1} parent=1 // pred_check
      _
    $region31: #{tpu_custom_call.1} parent=1 // pred_check_branch
      %32 = sbr.rel (0) target = $region33
    $region32: #{tpu_custom_call.1} parent=1 // pred_region
      _
    $region33: #{tpu_custom_call.1} parent=1 // pred_fallthru
      _
    // Predicated region
    $region34: #{tpu_custom_call.1} parent=1 // pred_check
      _
    $region35: #{tpu_custom_call.1} parent=1 // pred_check_branch
      %34 = sbr.rel (0) target = $region37
    $region36: #{tpu_custom_call.1} parent=1 // pred_region
      _
    $region37: #{tpu_custom_call.1} parent=1 // pred_fallthru
      _
    // Predicated region
    $region38: #{tpu_custom_call.1} parent=1 // pred_check
      _
    $region39: #{tpu_custom_call.1} parent=1 // pred_check_branch
      %36 = sbr.rel (0) target = $region41
    $region40: #{tpu_custom_call.1} parent=1 // pred_region
      _
    $region41: #{tpu_custom_call.1} parent=1 // pred_fallthru
      _
    // Predicated region
    $region42: #{tpu_custom_call.1} parent=1 // pred_check
      _
    $region43: #{tpu_custom_call.1} parent=1 // pred_check_branch
      %38 = sbr.rel (0) target = $region45
    $region44: #{tpu_custom_call.1} parent=1 // pred_region
      _
    $region45: #{tpu_custom_call.1} parent=1 // pred_fallthru
      _
    %v39 = vld [vmem:[%s0] sm:$0xff]
    %v40 = vld [vmem:[%s0 + $0x8] sm:$0xff]
    %v41 = vld [vmem:[%s0 + $0x10] sm:$0xff]
    %v42 = vld [vmem:[%s0 + $0x18] sm:$0xff]
    %v43 = vld [vmem:[%s3] sm:$0x1]
    %v44 = vmul.f32 %v39, %v39
    %v45 = vmul.f32 %v40, %v40
    %v46 = vmul.f32 %v41, %v41
    %v47 = vmul.f32 %v42, %v42
    %vm48 = vcmask 261120
    %v49 = vsel %vm48, %v44, 0.0
    %50 = vadd.xlane.f32.xlu0 %v49
    %v51 = vpop.xlane.xlu0 %50
    %v52 = vsel %vm48, %v45, 0.0
    %53 = vadd.xlane.f32.xlu0 %v52
    %v54 = vpop.xlane.xlu0 %53
    %v55 = vsel %vm48, %v46, 0.0
    %56 = vadd.xlane.f32.xlu0 %v55
    %v57 = vpop.xlane.xlu0 %56
    %v58 = vsel %vm48, %v47, 0.0
    %59 = vadd.xlane.f32.xlu0 %v58
    %v60 = vpop.xlane.xlu0 %59
    %v61 = vmul.f32 %v51, 0.03125
    %v62 = vmul.f32 %v54, 0.03125
    %v63 = vmul.f32 %v57, 0.03125
    %v64 = vmul.f32 %v60, 0.03125
    %v65 = vadd.f32 %v61, 1e-06
    %v66 = vadd.f32 %v62, 1e-06
    %v67 = vadd.f32 %v63, 1e-06
    %v68 = vadd.f32 %v64, 1e-06
    %v69 = vrsqrt.pop %v65
    %v70 = vrsqrt.pop %v66
    %v71 = vrsqrt.pop %v67
    %v72 = vrsqrt.pop %v68
    %v73 = vmul.f32 %v39, %v69
    %v74 = vmul.f32 %v40, %v70
    %v75 = vmul.f32 %v41, %v71
    %v76 = vmul.f32 %v42, %v72
    %v78 = vlaneseq
    %v79 = vshrl.u32 %v78, 7
    %v80 = vsub.s32 0, %v79
    %v81 = vrot.slane %v43, %v80
    %v83 = vmul.f32 %v73, %v81
    %v84 = vmul.f32 %v74, %v81
    %v85 = vmul.f32 %v75, %v81
    %v86 = vmul.f32 %v76, %v81
    %v87 = vld [vmem:[%s4] sm:$0xff]
    %v88 = vld [vmem:[%s4 + $0x8] sm:$0xff]
    %v89 = vld [vmem:[%s4 + $0x10] sm:$0xff]
    %v90 = vld [vmem:[%s4 + $0x18] sm:$0xff]
    %v91 = vld [vmem:[%s5] sm:$0x1]
    %v93 = vlaneseq
    %v94 = vshrl.u32 %v93, 7
    %v95 = vsub.s32 0, %v94
    %v96 = vrot.slane %v91, %v95
    %v99 = vsel %vm48, %v83, 0
    %v102 = vsel %vm48, %v84, 0
    %v105 = vsel %vm48, %v85, 0
    %v108 = vsel %vm48, %v86, 0
    %110 = vmatprep.subr.mxu0 0.0
    %111 = vmatpush1.msra.mxu0 %v87
    %112 = vmatprep.subr.mxu0 0.0
    %113 = vmatpush1.msra.mxu0 %v88
    %114 = vmatprep.subr.mxu0 0.0
    %115 = vmatpush1.msra.mxu0 %v89
    %116 = vmatprep.subr.mxu0 0.0
    %117 = vmatpush1.msra.mxu0 %v90
    %118 = vmatprep.subr.mxu0 0.0
    %119 = vmatpush1.msra.mxu0 0.0
    %120 = vmatprep.subr.mxu0 0.0
    %121 = vmatpush1.msra.mxu0 0.0
    %122 = vmatprep.subr.mxu0 0.0
    %123 = vmatpush1.msra.mxu0 0.0
    %124 = vmatprep.subr.mxu0 0.0
    %125 = vmatpush1.msra.mxu0 0.0
    %126 = vmatprep.subr.mxu0 0.0
    %127 = vmatpush1.msra.mxu0 0.0
    %128 = vmatprep.subr.mxu0 0.0
    %129 = vmatpush1.msra.mxu0 0.0
    %130 = vmatprep.subr.mxu0 0.0
    %131 = vmatpush1.msra.mxu0 0.0
    %132 = vmatprep.subr.mxu0 0.0
    %133 = vmatpush1.msra.mxu0 0.0
    %134 = vmatprep.subr.mxu0 0.0
    %135 = vmatpush1.msra.mxu0 0.0
    %136 = vmatprep.subr.mxu0 0.0
    %137 = vmatpush1.msra.mxu0 0.0
    %138 = vmatprep.subr.mxu0 0.0
    %139 = vmatpush1.msra.mxu0 0.0
    %140 = vmatprep.subr.mxu0 0.0
    %141 = vmatpush1.msra.mxu0 0.0
    %142 = vmatprep.subr.mxu0 0.0
    %143 = vmatpush1.msra.mxu0 0.0
    %144 = vmatprep.subr.mxu0 0.0
    %145 = vmatpush1.msra.mxu0 0.0
    %146 = vmatprep.subr.mxu0 0.0
    %147 = vmatpush1.msra.mxu0 0.0
    %148 = vmatprep.subr.mxu0 0.0
    %149 = vmatpush1.msra.mxu0 0.0
    %150 = vmatprep.subr.mxu0 0.0
    %151 = vmatpush1.msra.mxu0 0.0
    %152 = vmatprep.subr.mxu0 0.0
    %153 = vmatpush1.msra.mxu0 0.0
    %154 = vmatprep.subr.mxu0 0.0
    %155 = vmatpush1.msra.mxu0 0.0
    %156 = vmatprep.subr.mxu0 0.0
    %157 = vmatpush1.msra.mxu0 0.0
    %158 = vmatprep.subr.mxu0 0.0
    %159 = vmatpush1.msra.mxu0 0.0
    %160 = vmatprep.subr.mxu0 0.0
    %161 = vmatpush1.msra.mxu0 0.0
    %162 = vmatprep.subr.mxu0 0.0
    %163 = vmatpush1.msra.mxu0 0.0
    %164 = vmatprep.subr.mxu0 0.0
    %165 = vmatpush1.msra.mxu0 0.0
    %166 = vmatprep.subr.mxu0 0.0
    %167 = vmatpush1.msra.mxu0 0.0
    %168 = vmatprep.subr.mxu0 0.0
    %169 = vmatpush1.msra.mxu0 0.0
    %170 = vmatprep.subr.mxu0 0.0
    %171 = vmatpush1.msra.mxu0 0.0
    %172 = vmatprep.subr.mxu0 0.0
    %173 = vmatpush1.msra.mxu0 0.0
    %174 = vmatprep.mubr.f32.mxu0 0.0
    %175 = vmatmul.mubr.f32.gmra.mrb[0].mxu0 %v99
    %v176 = vpop.f32.mrb[0].mxu0
    %v177 = vadd.f32 %v96, %v176
    %v178 = vpop.f32.mrb[0].mxu0
    %179 = vmatprep.mubr.f32.mxu0 0.0
    %180 = vmatmul.mubr.f32.gmra.mrb[0].mxu0 %v102
    %v181 = vpop.f32.mrb[0].mxu0
    %v182 = vadd.f32 %v96, %v181
    %v183 = vpop.f32.mrb[0].mxu0
    %184 = vmatprep.mubr.f32.mxu0 0.0
    %185 = vmatmul.mubr.f32.gmra.mrb[0].mxu0 %v105
    %v186 = vpop.f32.mrb[0].mxu0
    %v187 = vadd.f32 %v96, %v186
    %v188 = vpop.f32.mrb[0].mxu0
    %189 = vmatprep.mubr.f32.mxu0 0.0
    %190 = vmatmul.mubr.f32.gmra.mrb[0].mxu0 %v108
    %v191 = vpop.f32.mrb[0].mxu0
    %v192 = vadd.f32 %v96, %v191
    %v193 = vpop.f32.mrb[0].mxu0
    %194 = vdwg.mxu0
    %v195 = vld [vmem:[%s2] sm:$0xff]
    %v196 = vld [vmem:[%s2 + $0x8] sm:$0xff]
    %v197 = vld [vmem:[%s2 + $0x10] sm:$0xff]
    %v198 = vld [vmem:[%s2 + $0x18] sm:$0xff]
    %v199 = vld [vmem:[%s2 + $0x20] sm:$0xff]
    %v200 = vld [vmem:[%s2 + $0x28] sm:$0xff]
    %v201 = vld [vmem:[%s2 + $0x30] sm:$0xff]
    %v202 = vld [vmem:[%s2 + $0x38] sm:$0xff]
    %v203 = vld [vmem:[%s2 + $0x40] sm:$0xff]
    %v204 = vld [vmem:[%s2 + $0x48] sm:$0xff]
    %v205 = vld [vmem:[%s2 + $0x50] sm:$0xff]
    %v206 = vld [vmem:[%s2 + $0x58] sm:$0xff]
    %v207 = vld [vmem:[%s2 + $0x60] sm:$0xff]
    %v208 = vld [vmem:[%s2 + $0x68] sm:$0xff]
    %v209 = vld [vmem:[%s2 + $0x70] sm:$0xff]
    %v210 = vld [vmem:[%s2 + $0x78] sm:$0xff]
    %227 = vrot.lane.b32.xlu0 %v195, 32
    %v228 = vpop.permute.xlu0 %227
    %229 = vrot.lane.b32.xlu0 %v196, 32
    %v230 = vpop.permute.xlu0 %229
    %231 = vrot.lane.b32.xlu0 %v197, 32
    %v232 = vpop.permute.xlu0 %231
    %233 = vrot.lane.b32.xlu0 %v198, 32
    %v234 = vpop.permute.xlu0 %233
    %235 = vrot.lane.b32.xlu0 %v199, 32
    %v236 = vpop.permute.xlu0 %235
    %237 = vrot.lane.b32.xlu0 %v200, 32
    %v238 = vpop.permute.xlu0 %237
    %239 = vrot.lane.b32.xlu0 %v201, 32
    %v240 = vpop.permute.xlu0 %239
    %241 = vrot.lane.b32.xlu0 %v202, 32
    %v242 = vpop.permute.xlu0 %241
    %243 = vrot.lane.b32.xlu0 %v203, 32
    %v244 = vpop.permute.xlu0 %243
    %245 = vrot.lane.b32.xlu0 %v204, 32
    %v246 = vpop.permute.xlu0 %245
    %247 = vrot.lane.b32.xlu0 %v205, 32
    %v248 = vpop.permute.xlu0 %247
    %249 = vrot.lane.b32.xlu0 %v206, 32
    %v250 = vpop.permute.xlu0 %249
    %251 = vrot.lane.b32.xlu0 %v207, 32
    %v252 = vpop.permute.xlu0 %251
    %253 = vrot.lane.b32.xlu0 %v208, 32
    %v254 = vpop.permute.xlu0 %253
    %255 = vrot.lane.b32.xlu0 %v209, 32
    %v256 = vpop.permute.xlu0 %255
    %257 = vrot.lane.b32.xlu0 %v210, 32
    %v258 = vpop.permute.xlu0 %257
    %v275 = vmul.f32 %v177, %v228
    %v276 = vmul.f32 %v182, %v230
    %v277 = vmul.f32 %v187, %v232
    %v278 = vmul.f32 %v192, %v234
    %v279 = vmul.f32 %v177, %v236
    %v280 = vmul.f32 %v182, %v238
    %v281 = vmul.f32 %v187, %v240
    %v282 = vmul.f32 %v192, %v242
    %v283 = vmul.f32 %v177, %v244
    %v284 = vmul.f32 %v182, %v246
    %v285 = vmul.f32 %v187, %v248
    %v286 = vmul.f32 %v192, %v250
    %v287 = vmul.f32 %v177, %v252
    %v288 = vmul.f32 %v182, %v254
    %v289 = vmul.f32 %v187, %v256
    %v290 = vmul.f32 %v192, %v258
    %v291 = vld [vmem:[%s1] sm:$0xff]
    %v292 = vld [vmem:[%s1 + $0x8] sm:$0xff]
    %v293 = vld [vmem:[%s1 + $0x10] sm:$0xff]
    %v294 = vld [vmem:[%s1 + $0x18] sm:$0xff]
    %311 = vrot.lane.b32.xlu0 %v275, 96
    %v312 = vpop.permute.xlu0 %311
    %313 = vrot.lane.b32.xlu0 %v276, 96
    %v314 = vpop.permute.xlu0 %313
    %315 = vrot.lane.b32.xlu0 %v277, 96
    %v316 = vpop.permute.xlu0 %315
    %317 = vrot.lane.b32.xlu0 %v278, 96
    %v318 = vpop.permute.xlu0 %317
    %319 = vrot.lane.b32.xlu0 %v279, 96
    %v320 = vpop.permute.xlu0 %319
    %321 = vrot.lane.b32.xlu0 %v280, 96
    %v322 = vpop.permute.xlu0 %321
    %323 = vrot.lane.b32.xlu0 %v281, 96
    %v324 = vpop.permute.xlu0 %323
    %325 = vrot.lane.b32.xlu0 %v282, 96
    %v326 = vpop.permute.xlu0 %325
    %327 = vrot.lane.b32.xlu0 %v283, 96
    %v328 = vpop.permute.xlu0 %327
    %329 = vrot.lane.b32.xlu0 %v284, 96
    %v330 = vpop.permute.xlu0 %329
    %331 = vrot.lane.b32.xlu0 %v285, 96
    %v332 = vpop.permute.xlu0 %331
    %333 = vrot.lane.b32.xlu0 %v286, 96
    %v334 = vpop.permute.xlu0 %333
    %335 = vrot.lane.b32.xlu0 %v287, 96
    %v336 = vpop.permute.xlu0 %335
    %337 = vrot.lane.b32.xlu0 %v288, 96
    %v338 = vpop.permute.xlu0 %337
    %339 = vrot.lane.b32.xlu0 %v289, 96
    %v340 = vpop.permute.xlu0 %339
    %341 = vrot.lane.b32.xlu0 %v290, 96
    %v342 = vpop.permute.xlu0 %341
    %v344 = vsel %vm48, %v177, 0
    %v347 = vsel %vm48, %v182, 0
    %v350 = vsel %vm48, %v187, 0
    %v353 = vsel %vm48, %v192, 0
    %v355 = vsel %vm48, %v312, 0
    %v357 = vsel %vm48, %v314, 0
    %v359 = vsel %vm48, %v316, 0
    %v361 = vsel %vm48, %v318, 0
    %v363 = vsel %vm48, %v320, 0
    %v365 = vsel %vm48, %v322, 0
    %v367 = vsel %vm48, %v324, 0
    %v369 = vsel %vm48, %v326, 0
    %v371 = vsel %vm48, %v328, 0
    %v373 = vsel %vm48, %v330, 0
    %v375 = vsel %vm48, %v332, 0
    %v377 = vsel %vm48, %v334, 0
    %v379 = vsel %vm48, %v336, 0
    %v381 = vsel %vm48, %v338, 0
    %v383 = vsel %vm48, %v340, 0
    %v385 = vsel %vm48, %v342, 0
    %387 = vmatprep.subr.mxu0 0.0
    %388 = vmatpush1.xpose.msra.mxu0 %v355
    %389 = vmatprep.subr.mxu0 0.0
    %390 = vmatpush1.xpose.msra.mxu0 %v357
    %391 = vmatprep.subr.mxu0 0.0
    %392 = vmatpush1.xpose.msra.mxu0 %v359
    %393 = vmatprep.subr.mxu0 0.0
    %394 = vmatpush1.xpose.msra.mxu0 %v361
    %395 = vmatprep.subr.mxu0 0.0
    %396 = vmatpush1.xpose.msra.mxu0 %v363
    %397 = vmatprep.subr.mxu0 0.0
    %398 = vmatpush1.xpose.msra.mxu0 %v365
    %399 = vmatprep.subr.mxu0 0.0
    %400 = vmatpush1.xpose.msra.mxu0 %v367
    %401 = vmatprep.subr.mxu0 0.0
    %402 = vmatpush1.xpose.msra.mxu0 %v369
    %403 = vmatprep.subr.mxu0 0.0
    %404 = vmatpush1.xpose.msra.mxu0 %v371
    %405 = vmatprep.subr.mxu0 0.0
    %406 = vmatpush1.xpose.msra.mxu0 %v373
    %407 = vmatprep.subr.mxu0 0.0
    %408 = vmatpush1.xpose.msra.mxu0 %v375
    %409 = vmatprep.subr.mxu0 0.0
    %410 = vmatpush1.xpose.msra.mxu0 %v377
    %411 = vmatprep.subr.mxu0 0.0
    %412 = vmatpush1.xpose.msra.mxu0 %v379
    %413 = vmatprep.subr.mxu0 0.0
    %414 = vmatpush1.xpose.msra.mxu0 %v381
    %415 = vmatprep.subr.mxu0 0.0
    %416 = vmatpush1.xpose.msra.mxu0 %v383
    %417 = vmatprep.subr.mxu0 0.0
    %418 = vmatpush1.xpose.msra.mxu0 %v385
    %419 = vmatprep.subr.mxu0 0.0
    %420 = vmatpush1.xpose.msra.mxu0 0.0
    %421 = vmatprep.subr.mxu0 0.0
    %422 = vmatpush1.xpose.msra.mxu0 0.0
    %423 = vmatprep.subr.mxu0 0.0
    %424 = vmatpush1.xpose.msra.mxu0 0.0
    %425 = vmatprep.subr.mxu0 0.0
    %426 = vmatpush1.xpose.msra.mxu0 0.0
    %427 = vmatprep.subr.mxu0 0.0
    %428 = vmatpush1.xpose.msra.mxu0 0.0
    %429 = vmatprep.subr.mxu0 0.0
    %430 = vmatpush1.xpose.msra.mxu0 0.0
    %431 = vmatprep.subr.mxu0 0.0
    %432 = vmatpush1.xpose.msra.mxu0 0.0
    %433 = vmatprep.subr.mxu0 0.0
    %434 = vmatpush1.xpose.msra.mxu0 0.0
    %435 = vmatprep.subr.mxu0 0.0
    %436 = vmatpush1.xpose.msra.mxu0 0.0
    %437 = vmatprep.subr.mxu0 0.0
    %438 = vmatpush1.xpose.msra.mxu0 0.0
    %439 = vmatprep.subr.mxu0 0.0
    %440 = vmatpush1.xpose.msra.mxu0 0.0
    %441 = vmatprep.subr.mxu0 0.0
    %442 = vmatpush1.xpose.msra.mxu0 0.0
    %443 = vmatprep.subr.mxu0 0.0
    %444 = vmatpush1.xpose.msra.mxu0 0.0
    %445 = vmatprep.subr.mxu0 0.0
    %446 = vmatpush1.xpose.msra.mxu0 0.0
    %447 = vmatprep.subr.mxu0 0.0
    %448 = vmatpush1.xpose.msra.mxu0 0.0
    %449 = vmatprep.subr.mxu0 0.0
    %450 = vmatpush1.xpose.msra.mxu0 0.0
    %451 = vmatprep.mubr.f32.mxu0 0.0
    %452 = vmatmul.mubr.f32.gmra.mrb[0].mxu0 %v344
    %v453 = vpop.f32.mrb[0].mxu0
    %v454 = vadd.f32 %v291, %v453
    %v455 = vpop.f32.mrb[0].mxu0
    %456 = vmatprep.mubr.f32.mxu0 0.0
    %457 = vmatmul.mubr.f32.gmra.mrb[0].mxu0 %v347
    %v458 = vpop.f32.mrb[0].mxu0
    %v459 = vadd.f32 %v292, %v458
    %v460 = vpop.f32.mrb[0].mxu0
    %461 = vmatprep.mubr.f32.mxu0 0.0
    %462 = vmatmul.mubr.f32.gmra.mrb[0].mxu0 %v350
    %v463 = vpop.f32.mrb[0].mxu0
    %v464 = vadd.f32 %v293, %v463
    %v465 = vpop.f32.mrb[0].mxu0
    %466 = vmatprep.mubr.f32.mxu0 0.0
    %467 = vmatmul.mubr.f32.gmra.mrb[0].mxu0 %v353
    %v468 = vpop.f32.mrb[0].mxu0
    %v469 = vadd.f32 %v294, %v468
    %v470 = vpop.f32.mrb[0].mxu0
    %471 = vdwg.mxu0
    %472 = vmax.xlane.f32.xlu0 %v454
    %v473 = vpop.xlane.xlu0 %472
    %474 = vmax.xlane.f32.xlu0 %v459
    %v475 = vpop.xlane.xlu0 %474
    %476 = vmax.xlane.f32.xlu0 %v464
    %v477 = vpop.xlane.xlu0 %476
    %478 = vmax.xlane.f32.xlu0 %v469
    %v479 = vpop.xlane.xlu0 %478
    %v480 = vsub.f32 %v454, %v473
    %v481 = vsub.f32 %v459, %v475
    %v482 = vsub.f32 %v464, %v477
    %v483 = vsub.f32 %v469, %v479
    %v484 = vmul.f32 %v480, 1.442695
    %v485 = vpow.pop %v484
    %v486 = vmul.f32 %v481, 1.442695
    %v487 = vpow.pop %v486
    %v488 = vmul.f32 %v482, 1.442695
    %v489 = vpow.pop %v488
    %v490 = vmul.f32 %v483, 1.442695
    %v491 = vpow.pop %v490
    %492 = vrot.lane.b32.xlu0 %v275, 64
    %v493 = vpop.permute.xlu0 %492
    %494 = vrot.lane.b32.xlu0 %v276, 64
    %v495 = vpop.permute.xlu0 %494
    %496 = vrot.lane.b32.xlu0 %v277, 64
    %v497 = vpop.permute.xlu0 %496
    %498 = vrot.lane.b32.xlu0 %v278, 64
    %v499 = vpop.permute.xlu0 %498
    %500 = vrot.lane.b32.xlu0 %v279, 64
    %v501 = vpop.permute.xlu0 %500
    %502 = vrot.lane.b32.xlu0 %v280, 64
    %v503 = vpop.permute.xlu0 %502
    %504 = vrot.lane.b32.xlu0 %v281, 64
    %v505 = vpop.permute.xlu0 %504
    %506 = vrot.lane.b32.xlu0 %v282, 64
    %v507 = vpop.permute.xlu0 %506
    %508 = vrot.lane.b32.xlu0 %v283, 64
    %v509 = vpop.permute.xlu0 %508
    %510 = vrot.lane.b32.xlu0 %v284, 64
    %v511 = vpop.permute.xlu0 %510
    %512 = vrot.lane.b32.xlu0 %v285, 64
    %v513 = vpop.permute.xlu0 %512
    %514 = vrot.lane.b32.xlu0 %v286, 64
    %v515 = vpop.permute.xlu0 %514
    %516 = vrot.lane.b32.xlu0 %v287, 64
    %v517 = vpop.permute.xlu0 %516
    %518 = vrot.lane.b32.xlu0 %v288, 64
    %v519 = vpop.permute.xlu0 %518
    %520 = vrot.lane.b32.xlu0 %v289, 64
    %v521 = vpop.permute.xlu0 %520
    %522 = vrot.lane.b32.xlu0 %v290, 64
    %v523 = vpop.permute.xlu0 %522
    %540 = vmatprep.subr.mxu0 0.0
    %541 = vmatpush1.msra.mxu0 %v493
    %542 = vmatprep.subr.mxu0 0.0
    %543 = vmatpush1.msra.mxu0 %v495
    %544 = vmatprep.subr.mxu0 0.0
    %545 = vmatpush1.msra.mxu0 %v497
    %546 = vmatprep.subr.mxu0 0.0
    %547 = vmatpush1.msra.mxu0 %v499
    %548 = vmatprep.subr.mxu0 0.0
    %549 = vmatpush1.msra.mxu0 %v501
    %550 = vmatprep.subr.mxu0 0.0
    %551 = vmatpush1.msra.mxu0 %v503
    %552 = vmatprep.subr.mxu0 0.0
    %553 = vmatpush1.msra.mxu0 %v505
    %554 = vmatprep.subr.mxu0 0.0
    %555 = vmatpush1.msra.mxu0 %v507
    %556 = vmatprep.subr.mxu0 0.0
    %557 = vmatpush1.msra.mxu0 %v509
    %558 = vmatprep.subr.mxu0 0.0
    %559 = vmatpush1.msra.mxu0 %v511
    %560 = vmatprep.subr.mxu0 0.0
    %561 = vmatpush1.msra.mxu0 %v513
    %562 = vmatprep.subr.mxu0 0.0
    %563 = vmatpush1.msra.mxu0 %v515
    %564 = vmatprep.subr.mxu0 0.0
    %565 = vmatpush1.msra.mxu0 %v517
    %566 = vmatprep.subr.mxu0 0.0
    %567 = vmatpush1.msra.mxu0 %v519
    %568 = vmatprep.subr.mxu0 0.0
    %569 = vmatpush1.msra.mxu0 %v521
    %570 = vmatprep.subr.mxu0 0.0
    %571 = vmatpush1.msra.mxu0 %v523
    %572 = vmatprep.subr.mxu0 0.0
    %573 = vmatpush1.msra.mxu0 0.0
    %574 = vmatprep.subr.mxu0 0.0
    %575 = vmatpush1.msra.mxu0 0.0
    %576 = vmatprep.subr.mxu0 0.0
    %577 = vmatpush1.msra.mxu0 0.0
    %578 = vmatprep.subr.mxu0 0.0
    %579 = vmatpush1.msra.mxu0 0.0
    %580 = vmatprep.subr.mxu0 0.0
    %581 = vmatpush1.msra.mxu0 0.0
    %582 = vmatprep.subr.mxu0 0.0
    %583 = vmatpush1.msra.mxu0 0.0
    %584 = vmatprep.subr.mxu0 0.0
    %585 = vmatpush1.msra.mxu0 0.0
    %586 = vmatprep.subr.mxu0 0.0
    %587 = vmatpush1.msra.mxu0 0.0
    %588 = vmatprep.subr.mxu0 0.0
    %589 = vmatpush1.msra.mxu0 0.0
    %590 = vmatprep.subr.mxu0 0.0
    %591 = vmatpush1.msra.mxu0 0.0
    %592 = vmatprep.subr.mxu0 0.0
    %593 = vmatpush1.msra.mxu0 0.0
    %594 = vmatprep.subr.mxu0 0.0
    %595 = vmatpush1.msra.mxu0 0.0
    %596 = vmatprep.subr.mxu0 0.0
    %597 = vmatpush1.msra.mxu0 0.0
    %598 = vmatprep.subr.mxu0 0.0
    %599 = vmatpush1.msra.mxu0 0.0
    %600 = vmatprep.subr.mxu0 0.0
    %601 = vmatpush1.msra.mxu0 0.0
    %602 = vmatprep.subr.mxu0 0.0
    %603 = vmatpush1.msra.mxu0 0.0
    %604 = vmatprep.mubr.f32.mxu0 0.0
    %605 = vmatmul.mubr.f32.gmra.mrb[0].mxu0 %v485
    %v606 = vpop.f32.mrb[0].mxu0
    %v607 = vadd.f32 0.0, %v606
    %v608 = vpop.f32.mrb[0].mxu0
    %609 = vmatprep.mubr.f32.mxu0 0.0
    %610 = vmatmul.mubr.f32.gmra.mrb[0].mxu0 %v487
    %v611 = vpop.f32.mrb[0].mxu0
    %v612 = vadd.f32 0.0, %v611
    %v613 = vpop.f32.mrb[0].mxu0
    %614 = vmatprep.mubr.f32.mxu0 0.0
    %615 = vmatmul.mubr.f32.gmra.mrb[0].mxu0 %v489
    %v616 = vpop.f32.mrb[0].mxu0
    %v617 = vadd.f32 0.0, %v616
    %v618 = vpop.f32.mrb[0].mxu0
    %619 = vmatprep.mubr.f32.mxu0 0.0
    %620 = vmatmul.mubr.f32.gmra.mrb[0].mxu0 %v491
    %v621 = vpop.f32.mrb[0].mxu0
    %v622 = vadd.f32 0.0, %v621
    %v623 = vpop.f32.mrb[0].mxu0
    %624 = vdwg.mxu0
    %v625 = vrcp.pop %v607
    %v626 = vrcp.pop %v612
    %v627 = vrcp.pop %v617
    %v628 = vrcp.pop %v622
    %633 = vrot.lane.b32.xlu0 %v625, 96
    %v634 = vpop.permute.xlu0 %633
    %635 = vrot.lane.b32.xlu0 %v626, 96
    %v636 = vpop.permute.xlu0 %635
    %637 = vrot.lane.b32.xlu0 %v627, 96
    %v638 = vpop.permute.xlu0 %637
    %639 = vrot.lane.b32.xlu0 %v628, 96
    %v640 = vpop.permute.xlu0 %639
    %v645 = vmul.f32 %v607, %v634
    %v646 = vmul.f32 %v612, %v636
    %v647 = vmul.f32 %v617, %v638
    %v648 = vmul.f32 %v622, %v640
    %v649 = vadd.f32 %v39, %v645
    %v650 = vadd.f32 %v40, %v646
    %v651 = vadd.f32 %v41, %v647
    %v652 = vadd.f32 %v42, %v648
    %v653 = vld [vmem:[%s6] sm:$0x1]
    %v654 = vmul.f32 %v649, %v649
    %v655 = vmul.f32 %v650, %v650
    %v656 = vmul.f32 %v651, %v651
    %v657 = vmul.f32 %v652, %v652
    %v658 = vsel %vm48, %v654, 0.0
    %659 = vadd.xlane.f32.xlu0 %v658
    %v660 = vpop.xlane.xlu0 %659
    %v661 = vsel %vm48, %v655, 0.0
    %662 = vadd.xlane.f32.xlu0 %v661
    %v663 = vpop.xlane.xlu0 %662
    %v664 = vsel %vm48, %v656, 0.0
    %665 = vadd.xlane.f32.xlu0 %v664
    %v666 = vpop.xlane.xlu0 %665
    %v667 = vsel %vm48, %v657, 0.0
    %668 = vadd.xlane.f32.xlu0 %v667
    %v669 = vpop.xlane.xlu0 %668
    %v670 = vmul.f32 %v660, 0.03125
    %v671 = vmul.f32 %v663, 0.03125
    %v672 = vmul.f32 %v666, 0.03125
    %v673 = vmul.f32 %v669, 0.03125
    %v674 = vadd.f32 %v670, 1e-06
    %v675 = vadd.f32 %v671, 1e-06
    %v676 = vadd.f32 %v672, 1e-06
    %v677 = vadd.f32 %v673, 1e-06
    %v678 = vrsqrt.pop %v674
    %v679 = vrsqrt.pop %v675
    %v680 = vrsqrt.pop %v676
    %v681 = vrsqrt.pop %v677
    %v682 = vmul.f32 %v649, %v678
    %v683 = vmul.f32 %v650, %v679
    %v684 = vmul.f32 %v651, %v680
    %v685 = vmul.f32 %v652, %v681
    %v687 = vlaneseq
    %v688 = vshrl.u32 %v687, 7
    %v689 = vsub.s32 0, %v688
    %v690 = vrot.slane %v653, %v689
    %v692 = vmul.f32 %v682, %v690
    %v693 = vmul.f32 %v683, %v690
    %v694 = vmul.f32 %v684, %v690
    %v695 = vmul.f32 %v685, %v690
    %v696 = vld [vmem:[%s7] sm:$0xff]
    %v697 = vld [vmem:[%s7 + $0x8] sm:$0xff]
    %v698 = vld [vmem:[%s7 + $0x10] sm:$0xff]
    %v699 = vld [vmem:[%s7 + $0x18] sm:$0xff]
    %v700 = vld [vmem:[%s8] sm:$0x1]
    %v702 = vlaneseq
    %v703 = vshrl.u32 %v702, 7
    %v704 = vsub.s32 0, %v703
    %v705 = vrot.slane %v700, %v704
    %v708 = vsel %vm48, %v692, 0
    %v711 = vsel %vm48, %v693, 0
    %v714 = vsel %vm48, %v694, 0
    %v717 = vsel %vm48, %v695, 0
    %719 = vmatprep.subr.mxu0 0.0
    %720 = vmatpush1.msra.mxu0 %v696
    %721 = vmatprep.subr.mxu0 0.0
    %722 = vmatpush1.msra.mxu0 %v697
    %723 = vmatprep.subr.mxu0 0.0
    %724 = vmatpush1.msra.mxu0 %v698
    %725 = vmatprep.subr.mxu0 0.0
    %726 = vmatpush1.msra.mxu0 %v699
    %727 = vmatprep.subr.mxu0 0.0
    %728 = vmatpush1.msra.mxu0 0.0
    %729 = vmatprep.subr.mxu0 0.0
    %730 = vmatpush1.msra.mxu0 0.0
    %731 = vmatprep.subr.mxu0 0.0
    %732 = vmatpush1.msra.mxu0 0.0
    %733 = vmatprep.subr.mxu0 0.0
    %734 = vmatpush1.msra.mxu0 0.0
    %735 = vmatprep.subr.mxu0 0.0
    %736 = vmatpush1.msra.mxu0 0.0
    %737 = vmatprep.subr.mxu0 0.0
    %738 = vmatpush1.msra.mxu0 0.0
    %739 = vmatprep.subr.mxu0 0.0
    %740 = vmatpush1.msra.mxu0 0.0
    %741 = vmatprep.subr.mxu0 0.0
    %742 = vmatpush1.msra.mxu0 0.0
    %743 = vmatprep.subr.mxu0 0.0
    %744 = vmatpush1.msra.mxu0 0.0
    %745 = vmatprep.subr.mxu0 0.0
    %746 = vmatpush1.msra.mxu0 0.0
    %747 = vmatprep.subr.mxu0 0.0
    %748 = vmatpush1.msra.mxu0 0.0
    %749 = vmatprep.subr.mxu0 0.0
    %750 = vmatpush1.msra.mxu0 0.0
    %751 = vmatprep.subr.mxu0 0.0
    %752 = vmatpush1.msra.mxu0 0.0
    %753 = vmatprep.subr.mxu0 0.0
    %754 = vmatpush1.msra.mxu0 0.0
    %755 = vmatprep.subr.mxu0 0.0
    %756 = vmatpush1.msra.mxu0 0.0
    %757 = vmatprep.subr.mxu0 0.0
    %758 = vmatpush1.msra.mxu0 0.0
    %759 = vmatprep.subr.mxu0 0.0
    %760 = vmatpush1.msra.mxu0 0.0
    %761 = vmatprep.subr.mxu0 0.0
    %762 = vmatpush1.msra.mxu0 0.0
    %763 = vmatprep.subr.mxu0 0.0
    %764 = vmatpush1.msra.mxu0 0.0
    %765 = vmatprep.subr.mxu0 0.0
    %766 = vmatpush1.msra.mxu0 0.0
    %767 = vmatprep.subr.mxu0 0.0
    %768 = vmatpush1.msra.mxu0 0.0
    %769 = vmatprep.subr.mxu0 0.0
    %770 = vmatpush1.msra.mxu0 0.0
    %771 = vmatprep.subr.mxu0 0.0
    %772 = vmatpush1.msra.mxu0 0.0
    %773 = vmatprep.subr.mxu0 0.0
    %774 = vmatpush1.msra.mxu0 0.0
    %775 = vmatprep.subr.mxu0 0.0
    %776 = vmatpush1.msra.mxu0 0.0
    %777 = vmatprep.subr.mxu0 0.0
    %778 = vmatpush1.msra.mxu0 0.0
    %779 = vmatprep.subr.mxu0 0.0
    %780 = vmatpush1.msra.mxu0 0.0
    %781 = vmatprep.subr.mxu0 0.0
    %782 = vmatpush1.msra.mxu0 0.0
    %783 = vmatprep.mubr.f32.mxu0 0.0
    %784 = vmatmul.mubr.f32.gmra.mrb[0].mxu0 %v708
    %v785 = vpop.f32.mrb[0].mxu0
    %v786 = vadd.f32 %v705, %v785
    %v787 = vpop.f32.mrb[0].mxu0
    %788 = vmatprep.mubr.f32.mxu0 0.0
    %789 = vmatmul.mubr.f32.gmra.mrb[0].mxu0 %v711
    %v790 = vpop.f32.mrb[0].mxu0
    %v791 = vadd.f32 %v705, %v790
    %v792 = vpop.f32.mrb[0].mxu0
    %793 = vmatprep.mubr.f32.mxu0 0.0
    %794 = vmatmul.mubr.f32.gmra.mrb[0].mxu0 %v714
    %v795 = vpop.f32.mrb[0].mxu0
    %v796 = vadd.f32 %v705, %v795
    %v797 = vpop.f32.mrb[0].mxu0
    %798 = vmatprep.mubr.f32.mxu0 0.0
    %799 = vmatmul.mubr.f32.gmra.mrb[0].mxu0 %v717
    %v800 = vpop.f32.mrb[0].mxu0
    %v801 = vadd.f32 %v705, %v800
    %v802 = vpop.f32.mrb[0].mxu0
    %803 = vdwg.mxu0
    %v804 = vxor.u32 %v786, 2147483648
    %v805 = vxor.u32 %v791, 2147483648
    %v806 = vxor.u32 %v796, 2147483648
    %v807 = vxor.u32 %v801, 2147483648
    %v808 = vmul.f32 %v804, 1.442695
    %v809 = vpow.pop %v808
    %v810 = vmul.f32 %v805, 1.442695
    %v811 = vpow.pop %v810
    %v812 = vmul.f32 %v806, 1.442695
    %v813 = vpow.pop %v812
    %v814 = vmul.f32 %v807, 1.442695
    %v815 = vpow.pop %v814
    %v816 = vadd.f32 %v809, 1.0
    %v817 = vadd.f32 %v811, 1.0
    %v818 = vadd.f32 %v813, 1.0
    %v819 = vadd.f32 %v815, 1.0
    %v820 = vrcp.pop %v816
    %v821 = vmul.f32 1.0, %v820
    %v822 = vrcp.pop %v817
    %v823 = vmul.f32 1.0, %v822
    %v824 = vrcp.pop %v818
    %v825 = vmul.f32 1.0, %v824
    %v826 = vrcp.pop %v819
    %v827 = vmul.f32 1.0, %v826
    %v828 = vmul.f32 %v786, %v821
    %v829 = vmul.f32 %v791, %v823
    %v830 = vmul.f32 %v796, %v825
    %v831 = vmul.f32 %v801, %v827
    %836 = vrot.lane.b32.xlu0 %v786, 64
    %v837 = vpop.permute.xlu0 %836
    %838 = vrot.lane.b32.xlu0 %v791, 64
    %v839 = vpop.permute.xlu0 %838
    %840 = vrot.lane.b32.xlu0 %v796, 64
    %v841 = vpop.permute.xlu0 %840
    %842 = vrot.lane.b32.xlu0 %v801, 64
    %v843 = vpop.permute.xlu0 %842
    %v848 = vmul.f32 %v828, %v837
    %v849 = vmul.f32 %v829, %v839
    %v850 = vmul.f32 %v830, %v841
    %v851 = vmul.f32 %v831, %v843
    %v852 = vld [vmem:[%s9] sm:$0xff]
    %v853 = vld [vmem:[%s9 + $0x8] sm:$0xff]
    %v854 = vld [vmem:[%s9 + $0x10] sm:$0xff]
    %v855 = vld [vmem:[%s9 + $0x18] sm:$0xff]
    %v856 = vld [vmem:[%s9 + $0x20] sm:$0xff]
    %v857 = vld [vmem:[%s9 + $0x28] sm:$0xff]
    %v858 = vld [vmem:[%s9 + $0x30] sm:$0xff]
    %v859 = vld [vmem:[%s9 + $0x38] sm:$0xff]
    %v860 = vld [vmem:[%s10] sm:$0x1]
    %v862 = vlaneseq
    %v863 = vshrl.u32 %v862, 7
    %v864 = vsub.s32 0, %v863
    %v865 = vrot.slane %v860, %v864
    %vm867 = vcmask 523264
    %v869 = vsel %vm867, %v848, 0
    %v872 = vsel %vm867, %v849, 0
    %v875 = vsel %vm867, %v850, 0
    %v878 = vsel %vm867, %v851, 0
    %880 = vmatprep.subr.mxu0 0.0
    %881 = vmatpush1.msra.mxu0 %v852
    %882 = vmatprep.subr.mxu0 0.0
    %883 = vmatpush1.msra.mxu0 %v853
    %884 = vmatprep.subr.mxu0 0.0
    %885 = vmatpush1.msra.mxu0 %v854
    %886 = vmatprep.subr.mxu0 0.0
    %887 = vmatpush1.msra.mxu0 %v855
    %888 = vmatprep.subr.mxu0 0.0
    %889 = vmatpush1.msra.mxu0 %v856
    %890 = vmatprep.subr.mxu0 0.0
    %891 = vmatpush1.msra.mxu0 %v857
    %892 = vmatprep.subr.mxu0 0.0
    %893 = vmatpush1.msra.mxu0 %v858
    %894 = vmatprep.subr.mxu0 0.0
    %895 = vmatpush1.msra.mxu0 %v859
    %896 = vmatprep.subr.mxu0 0.0
    %897 = vmatpush1.msra.mxu0 0.0
    %898 = vmatprep.subr.mxu0 0.0
    %899 = vmatpush1.msra.mxu0 0.0
    %900 = vmatprep.subr.mxu0 0.0
    %901 = vmatpush1.msra.mxu0 0.0
    %902 = vmatprep.subr.mxu0 0.0
    %903 = vmatpush1.msra.mxu0 0.0
    %904 = vmatprep.subr.mxu0 0.0
    %905 = vmatpush1.msra.mxu0 0.0
    %906 = vmatprep.subr.mxu0 0.0
    %907 = vmatpush1.msra.mxu0 0.0
    %908 = vmatprep.subr.mxu0 0.0
    %909 = vmatpush1.msra.mxu0 0.0
    %910 = vmatprep.subr.mxu0 0.0
    %911 = vmatpush1.msra.mxu0 0.0
    %912 = vmatprep.subr.mxu0 0.0
    %913 = vmatpush1.msra.mxu0 0.0
    %914 = vmatprep.subr.mxu0 0.0
    %915 = vmatpush1.msra.mxu0 0.0
    %916 = vmatprep.subr.mxu0 0.0
    %917 = vmatpush1.msra.mxu0 0.0
    %918 = vmatprep.subr.mxu0 0.0
    %919 = vmatpush1.msra.mxu0 0.0
    %920 = vmatprep.subr.mxu0 0.0
    %921 = vmatpush1.msra.mxu0 0.0
    %922 = vmatprep.subr.mxu0 0.0
    %923 = vmatpush1.msra.mxu0 0.0
    %924 = vmatprep.subr.mxu0 0.0
    %925 = vmatpush1.msra.mxu0 0.0
    %926 = vmatprep.subr.mxu0 0.0
    %927 = vmatpush1.msra.mxu0 0.0
    %928 = vmatprep.subr.mxu0 0.0
    %929 = vmatpush1.msra.mxu0 0.0
    %930 = vmatprep.subr.mxu0 0.0
    %931 = vmatpush1.msra.mxu0 0.0
    %932 = vmatprep.subr.mxu0 0.0
    %933 = vmatpush1.msra.mxu0 0.0
    %934 = vmatprep.subr.mxu0 0.0
    %935 = vmatpush1.msra.mxu0 0.0
    %936 = vmatprep.subr.mxu0 0.0
    %937 = vmatpush1.msra.mxu0 0.0
    %938 = vmatprep.subr.mxu0 0.0
    %939 = vmatpush1.msra.mxu0 0.0
    %940 = vmatprep.subr.mxu0 0.0
    %941 = vmatpush1.msra.mxu0 0.0
    %942 = vmatprep.subr.mxu0 0.0
    %943 = vmatpush1.msra.mxu0 0.0
    %944 = vmatprep.mubr.f32.mxu0 0.0
    %945 = vmatmul.mubr.f32.gmra.mrb[0].mxu0 %v869
    %v946 = vpop.f32.mrb[0].mxu0
    %v947 = vadd.f32 %v865, %v946
    %v948 = vpop.f32.mrb[0].mxu0
    %949 = vmatprep.mubr.f32.mxu0 0.0
    %950 = vmatmul.mubr.f32.gmra.mrb[0].mxu0 %v872
    %v951 = vpop.f32.mrb[0].mxu0
    %v952 = vadd.f32 %v865, %v951
    %v953 = vpop.f32.mrb[0].mxu0
    %954 = vmatprep.mubr.f32.mxu0 0.0
    %955 = vmatmul.mubr.f32.gmra.mrb[0].mxu0 %v875
    %v956 = vpop.f32.mrb[0].mxu0
    %v957 = vadd.f32 %v865, %v956
    %v958 = vpop.f32.mrb[0].mxu0
    %959 = vmatprep.mubr.f32.mxu0 0.0
    %960 = vmatmul.mubr.f32.gmra.mrb[0].mxu0 %v878
    %v961 = vpop.f32.mrb[0].mxu0
    %v962 = vadd.f32 %v865, %v961
    %v963 = vpop.f32.mrb[0].mxu0
    %964 = vdwg.mxu0
    %v965 = vadd.f32 %v649, %v947
    %v966 = vadd.f32 %v650, %v952
    %v967 = vadd.f32 %v651, %v957
    %v968 = vadd.f32 %v652, %v962
    %969 = vst.msk [vmem:[#allocation2] sm:$0xff] %vm48, %v965
    %970 = vst.msk [vmem:[#allocation2 + $0x8] sm:$0xff] %vm48, %v966
    %971 = vst.msk [vmem:[#allocation2 + $0x10] sm:$0xff] %vm48, %v967
    %972 = vst.msk [vmem:[#allocation2 + $0x18] sm:$0xff] %vm48, %v968
    // Predicated region
    $region46: #{tpu_custom_call.1} parent=1 // pred_check
      _
    $region47: #{tpu_custom_call.1} parent=1 // pred_check_branch
      %974 = sbr.rel (0) target = $region49
    $region48: #{tpu_custom_call.1} parent=1 // pred_region
      %s976 = ssub.s32 512, 512
      %977 = vsyncadd [#allocation3], %s976
      %s978 = sshll.u32 [#allocation2], 4
      %s979 = int_to_ptr.vmem [resolvable:$true] %s978
      %984 = dma.vmem_to_hbm [thread:$0]  %s979, 512, %s11, [#allocation3], 128, 128, 8
    $region49: #{tpu_custom_call.1} parent=1 // pred_fallthru
      _
    // Predicated region
    $region50: #{tpu_custom_call.1} parent=1 // pred_check
      _
    $region51: #{tpu_custom_call.1} parent=1 // pred_check_branch
      %986 = sbr.rel (0) target = $region53
    $region52: #{tpu_custom_call.1} parent=1 // pred_region
      %987 = dma.done [#allocation3], 512
    $region53: #{tpu_custom_call.1} parent=1 // pred_fallthru
      _
    %988 = vsyncpa [#allocation3], 1

</llo_original>
